<compile_context>
chip_gen: v7x
topology: tpu7x:2x2x1
jax: 0.10.0
libtpu: 0.0.40
codegen_flags: <defaults>
</compile_context>

<pallas_src>
import functools

import jax
import jax.numpy as jnp
from jax.experimental import pallas as pl
from jax.experimental.pallas import tpu as pltpu


def _edge_scorer_kernel(src_ref, dst_ref, ht_ref, wu_ref, wv_ref, b_ref,
                        out_ref):
    """Score one tile of edges (transposed layout, lane-dense on edges).

    src_ref, dst_ref : (1, TE)  int32 endpoint node ids for this edge tile
    ht_ref           : (F, N)   node features, transposed, VMEM-resident, f32
    wu_ref, wv_ref   : (C, F)   linear weight split into src / dst halves, f32
    b_ref            : (C, 1)   bias, f32
    out_ref          : (C, TE)  scores^T  (TE on the lane axis -> dense stores)
    """
    n_nodes = ht_ref.shape[1]
    tile_e = src_ref.shape[1]

    # In-kernel gather via one-hot matmul on the MXU:
    #   onehot[n, e] = 1 if edge e's endpoint is node n else 0
    node_ids = jax.lax.broadcasted_iota(jnp.int32, (n_nodes, tile_e), 0)
    onehot_u = jnp.where(node_ids == src_ref[...], 1.0, 0.0).astype(jnp.float32)
    onehot_v = jnp.where(node_ids == dst_ref[...], 1.0, 0.0).astype(jnp.float32)

    # (F, N) @ (N, TE) -> (F, TE): exact row gather (one nonzero per column).
    hu_t = jnp.dot(ht_ref[...], onehot_u, preferred_element_type=jnp.float32)
    hv_t = jnp.dot(ht_ref[...], onehot_v, preferred_element_type=jnp.float32)

    # Split-weight dual dots == W @ concat(h_u, h_v); accumulate in f32.
    acc = jnp.dot(wu_ref[...], hu_t, preferred_element_type=jnp.float32)  # (C, TE)
    acc = acc + jnp.dot(wv_ref[...], hv_t, preferred_element_type=jnp.float32)
    out_ref[...] = (acc + b_ref[...]).astype(out_ref.dtype)


def mlp_predictor(h, src, dst, w, b, *, edge_tile=256):
    """Edge scores = Linear(concat(h[src], h[dst])).

    h:   (N, F) float32 node features
    src: (E,)   int32 source node ids
    dst: (E,)   int32 destination node ids
    w:   (C, 2F) float32 (PyTorch nn.Linear weight layout)
    b:   (C,)    float32
    returns (E, C) float32
    """
    N, F = h.shape
    C = w.shape[0]
    E = src.shape[0]
    assert w.shape[1] == 2 * F
    assert edge_tile % 128 == 0, "edge_tile must be a multiple of 128 lanes"

    num_tiles = pl.cdiv(E, edge_tile)
    e_pad = num_tiles * edge_tile

    # Pad edge index lists (padded edges reference node 0; results sliced off).
    src_p = jnp.zeros((1, e_pad), jnp.int32).at[0, :E].set(src.astype(jnp.int32))
    dst_p = jnp.zeros((1, e_pad), jnp.int32).at[0, :E].set(dst.astype(jnp.int32))

    # Resident operands: transposed node table + split weights, all f32.
    ht = h.T.astype(jnp.float32)                 # (F, N)
    wu = w[:, :F].astype(jnp.float32)            # (C, F)  -> acts on h[src]
    wv = w[:, F:].astype(jnp.float32)            # (C, F)  -> acts on h[dst]
    b2 = b.reshape(C, 1).astype(jnp.float32)

    cost = pl.CostEstimate(
        flops=2 * e_pad * N * F * 2 + 2 * e_pad * F * C * 2,
        transcendentals=0,
        bytes_accessed=(2 * e_pad * 4            # src/dst indices
                        + F * N * 4              # resident node features
                        + 2 * C * F * 4 + C * 4  # weights + bias
                        + C * e_pad * 4),        # output scores
    )

    out_t = pl.pallas_call(
        _edge_scorer_kernel,
        out_shape=jax.ShapeDtypeStruct((C, e_pad), jnp.float32),
        grid_spec=pltpu.PrefetchScalarGridSpec(
            num_scalar_prefetch=0,
            grid=(num_tiles,),
            in_specs=[
                pl.BlockSpec((1, edge_tile), lambda i: (0, i)),   # src tile
                pl.BlockSpec((1, edge_tile), lambda i: (0, i)),   # dst tile
                pl.BlockSpec((F, N), lambda i: (0, 0)),           # resident h^T
                pl.BlockSpec((C, F), lambda i: (0, 0)),           # W_u
                pl.BlockSpec((C, F), lambda i: (0, 0)),           # W_v
                pl.BlockSpec((C, 1), lambda i: (0, 0)),           # bias
            ],
            out_specs=pl.BlockSpec((C, edge_tile), lambda i: (0, i)),
        ),
        compiler_params=pltpu.CompilerParams(
            dimension_semantics=("parallel",)),
        cost_estimate=cost,
    )(src_p, dst_p, ht, wu, wv, b2)

    return out_t[:, :E].T                          # (E, C)


if __name__ == "__main__":
    # KarateClub-scale graph, predictor head shapes from the original Model:
    # MLPPredictor(out_features=16, out_classes=2), 34 nodes, 156 directed edges.
    num_nodes = 34
    feat_dim = 16
    num_classes = 2
    num_edges = 156

    key = jax.random.PRNGKey(0)
    k_h, k_w, k_b, k_src, k_dst = jax.random.split(key, 5)

    h = jax.random.normal(k_h, (num_nodes, feat_dim), dtype=jnp.float32)
    src = jax.random.randint(k_src, (num_edges,), 0, num_nodes, dtype=jnp.int32)
    dst = jax.random.randint(k_dst, (num_edges,), 0, num_nodes, dtype=jnp.int32)

    fan_in = 2 * feat_dim
    bound = 1.0 / (fan_in ** 0.5)
    W = jax.random.uniform(k_w, (num_classes, fan_in), dtype=jnp.float32,
                           minval=-bound, maxval=bound)
    bias = jax.random.uniform(k_b, (num_classes,), dtype=jnp.float32,
                              minval=-bound, maxval=bound)

    scorer = jax.jit(functools.partial(mlp_predictor, edge_tile=256))
    scores = jax.block_until_ready(scorer(h, src, dst, W, bias))
    assert scores.shape == (num_edges, num_classes)

    # Pure-f32 reference: score = W @ concat(h[src], h[dst]) + b.
    cat = jnp.concatenate([h[src], h[dst]], axis=1)
    ref = jnp.dot(cat, W.T, precision=jax.lax.Precision.HIGHEST) + bias
    assert jnp.allclose(scores, ref, atol=1e-4, rtol=1e-4), \
        float(jnp.max(jnp.abs(scores - ref)))

    print("KERNEL_OK")
</pallas_src>

<mosaic_0001>
module attributes {stable_mosaic.version = 11 : i64} {
  func.func @_edge_scorer_kernel(%arg0: i32, %arg1: memref<1x256xi32, #tpu.memory_space<vmem>>, %arg2: memref<1x256xi32, #tpu.memory_space<vmem>>, %arg3: memref<16x34xf32, #tpu.memory_space<vmem>>, %arg4: memref<2x16xf32, #tpu.memory_space<vmem>>, %arg5: memref<2x16xf32, #tpu.memory_space<vmem>>, %arg6: memref<2x1xf32, #tpu.memory_space<vmem>>, %arg7: memref<2x256xf32, #tpu.memory_space<vmem>>) attributes {dimension_semantics = [#tpu.dimension_semantics<parallel>], iteration_bounds = array<i64: 1>, scalar_prefetch = 0 : i64, scratch_operands = 0 : i64, tpu.core_type = #tpu.core_type<tc>, window_params = [{transform_indices = @transform_0, window_bounds = array<i64: 1, 256>}, {transform_indices = @transform_1, window_bounds = array<i64: 1, 256>}, {pipeline_mode = #tpu.pipeline_mode<synchronous>, transform_indices = @transform_2, window_bounds = array<i64: 16, 34>}, {pipeline_mode = #tpu.pipeline_mode<synchronous>, transform_indices = @transform_3, window_bounds = array<i64: 2, 16>}, {pipeline_mode = #tpu.pipeline_mode<synchronous>, transform_indices = @transform_4, window_bounds = array<i64: 2, 16>}, {pipeline_mode = #tpu.pipeline_mode<synchronous>, transform_indices = @transform_5, window_bounds = array<i64: 2, 1>}, {transform_indices = @transform_6, window_bounds = array<i64: 2, 256>}]} {
    %0 = tpu.iota {dimensions = array<i32: 0>} : vector<34x256xi32>
    %c0 = arith.constant 0 : index
    %c0_0 = arith.constant 0 : index
    %1 = vector.load %arg1[%c0, %c0_0] : memref<1x256xi32, #tpu.memory_space<vmem>>, vector<1x256xi32>
    %2 = vector.broadcast %1 : vector<1x256xi32> to vector<34x256xi32>
    %3 = arith.cmpi eq, %0, %2 : vector<34x256xi32>
    %cst = arith.constant 1.000000e+00 : f32
    %cst_1 = arith.constant 0.000000e+00 : f32
    %4 = vector.broadcast %cst : f32 to vector<34x256xf32>
    %5 = vector.broadcast %cst_1 : f32 to vector<34x256xf32>
    %6 = arith.select %3, %4, %5 : vector<34x256xi1>, vector<34x256xf32>
    %c0_2 = arith.constant 0 : index
    %c0_3 = arith.constant 0 : index
    %7 = vector.load %arg2[%c0_2, %c0_3] : memref<1x256xi32, #tpu.memory_space<vmem>>, vector<1x256xi32>
    %8 = vector.broadcast %7 : vector<1x256xi32> to vector<34x256xi32>
    %9 = arith.cmpi eq, %0, %8 : vector<34x256xi32>
    %cst_4 = arith.constant 1.000000e+00 : f32
    %cst_5 = arith.constant 0.000000e+00 : f32
    %10 = vector.broadcast %cst_4 : f32 to vector<34x256xf32>
    %11 = vector.broadcast %cst_5 : f32 to vector<34x256xf32>
    %12 = arith.select %9, %10, %11 : vector<34x256xi1>, vector<34x256xf32>
    %c0_6 = arith.constant 0 : index
    %c0_7 = arith.constant 0 : index
    %13 = vector.load %arg3[%c0_6, %c0_7] : memref<16x34xf32, #tpu.memory_space<vmem>>, vector<16x34xf32>
    %cst_8 = arith.constant dense<0.000000e+00> : vector<16x256xf32>
    %14 = tpu.matmul %13, %6, %cst_8 {dimension_numbers = #tpu.dot_dimension_numbers<[1], [0], [0], [1], [0, 0, 1, 1], [], []>} : vector<16x34xf32>, vector<34x256xf32>, vector<16x256xf32> -> vector<16x256xf32>
    %c0_9 = arith.constant 0 : index
    %c0_10 = arith.constant 0 : index
    %15 = vector.load %arg3[%c0_9, %c0_10] : memref<16x34xf32, #tpu.memory_space<vmem>>, vector<16x34xf32>
    %cst_11 = arith.constant dense<0.000000e+00> : vector<16x256xf32>
    %16 = tpu.matmul %15, %12, %cst_11 {dimension_numbers = #tpu.dot_dimension_numbers<[1], [0], [0], [1], [0, 0, 1, 1], [], []>} : vector<16x34xf32>, vector<34x256xf32>, vector<16x256xf32> -> vector<16x256xf32>
    %c0_12 = arith.constant 0 : index
    %c0_13 = arith.constant 0 : index
    %17 = vector.load %arg4[%c0_12, %c0_13] : memref<2x16xf32, #tpu.memory_space<vmem>>, vector<2x16xf32>
    %cst_14 = arith.constant dense<0.000000e+00> : vector<2x256xf32>
    %18 = tpu.matmul %17, %14, %cst_14 {dimension_numbers = #tpu.dot_dimension_numbers<[1], [0], [0], [1], [0, 0, 1, 1], [], []>} : vector<2x16xf32>, vector<16x256xf32>, vector<2x256xf32> -> vector<2x256xf32>
    %c0_15 = arith.constant 0 : index
    %c0_16 = arith.constant 0 : index
    %19 = vector.load %arg5[%c0_15, %c0_16] : memref<2x16xf32, #tpu.memory_space<vmem>>, vector<2x16xf32>
    %cst_17 = arith.constant dense<0.000000e+00> : vector<2x256xf32>
    %20 = tpu.matmul %19, %16, %cst_17 {dimension_numbers = #tpu.dot_dimension_numbers<[1], [0], [0], [1], [0, 0, 1, 1], [], []>} : vector<2x16xf32>, vector<16x256xf32>, vector<2x256xf32> -> vector<2x256xf32>
    %21 = arith.addf %18, %20 : vector<2x256xf32>
    %c0_18 = arith.constant 0 : index
    %c0_19 = arith.constant 0 : index
    %22 = vector.load %arg6[%c0_18, %c0_19] : memref<2x1xf32, #tpu.memory_space<vmem>>, vector<2x1xf32>
    %23 = vector.broadcast %22 : vector<2x1xf32> to vector<2x256xf32>
    %24 = arith.addf %21, %23 : vector<2x256xf32>
    %c0_20 = arith.constant 0 : index
    %c0_21 = arith.constant 0 : index
    %25 = vector.load %arg7[%c0_20, %c0_21] : memref<2x256xf32, #tpu.memory_space<vmem>>, vector<2x256xf32>
    tpu.vector_store %arg7[%c0_20, %c0_21], %24 {strides = array<i32>} : memref<2x256xf32, #tpu.memory_space<vmem>>, vector<2x256xf32>,
    return
  }
  func.func @transform_0(%arg0: i32) -> (i32, i32) {
    %c0_i32 = arith.constant 0 : i32
    %c0_i32_0 = arith.constant 0 : i32
    return %c0_i32, %arg0 : i32, i32
  }
  func.func @transform_1(%arg0: i32) -> (i32, i32) {
    %c0_i32 = arith.constant 0 : i32
    %c0_i32_0 = arith.constant 0 : i32
    return %c0_i32, %arg0 : i32, i32
  }
  func.func @transform_2(%arg0: i32) -> (i32, i32) {
    %c0_i32 = arith.constant 0 : i32
    %c0_i32_0 = arith.constant 0 : i32
    %c0_i32_1 = arith.constant 0 : i32
    return %c0_i32, %c0_i32_0 : i32, i32
  }
  func.func @transform_3(%arg0: i32) -> (i32, i32) {
    %c0_i32 = arith.constant 0 : i32
    %c0_i32_0 = arith.constant 0 : i32
    %c0_i32_1 = arith.constant 0 : i32
    return %c0_i32, %c0_i32_0 : i32, i32
  }
  func.func @transform_4(%arg0: i32) -> (i32, i32) {
    %c0_i32 = arith.constant 0 : i32
    %c0_i32_0 = arith.constant 0 : i32
    %c0_i32_1 = arith.constant 0 : i32
    return %c0_i32, %c0_i32_0 : i32, i32
  }
  func.func @transform_5(%arg0: i32) -> (i32, i32) {
    %c0_i32 = arith.constant 0 : i32
    %c0_i32_0 = arith.constant 0 : i32
    %c0_i32_1 = arith.constant 0 : i32
    return %c0_i32, %c0_i32_0 : i32, i32
  }
  func.func @transform_6(%arg0: i32) -> (i32, i32) {
    %c0_i32 = arith.constant 0 : i32
    %c0_i32_0 = arith.constant 0 : i32
    return %c0_i32, %arg0 : i32, i32
  }
}

</mosaic_0001>

<llo_original>
// kernel: mlp_predictor.1
$region0: #{mlp_predictor.1}
  #allocation0 [shape = 'u32[]', space=smem, size = 0x4, offset = 0x4, fixed_abs, tag = 'smem constant byte address 0x4 - core index']
  #allocation1 [shape = 'u32[144,128]{1,0:T(1,128)}', space=vmem, size = 0x12000, scoped, tag = 'internal scratch']
  %s0 = inlined_call_operand.vmem [shape: s32[1,256], index: 0, kind: input, shape index: {}]
  %s1 = inlined_call_operand.vmem [shape: s32[1,256], index: 1, kind: input, shape index: {}]
  %s2 = inlined_call_operand.vmem [shape: f32[16,34], index: 2, kind: input, shape index: {}]
  %s3 = inlined_call_operand.vmem [shape: f32[2,16], index: 3, kind: input, shape index: {}]
  %s4 = inlined_call_operand.vmem [shape: f32[2,16], index: 4, kind: input, shape index: {}]
  %s5 = inlined_call_operand.vmem [shape: f32[2,1], index: 5, kind: input, shape index: {}]
  %s6 = inlined_call_operand.vmem [shape: f32[2,256], index: 6, kind: output, shape index: {}]
  %s7 = sld [smem:[#allocation0]]
  $region34: #{mlp_predictor.1} parent=0
    _
  %s9 = ssub.s32 1, %s7
  %s10 = scalar_select 0, %s9, %s7
  // Predicated region
  $region2: #{mlp_predictor.1} parent=0 // pred_check
    _
  $region3: #{mlp_predictor.1} parent=0 // pred_check_branch
    %12 = sbr.rel (0) target = $region5
  $region4: #{mlp_predictor.1} parent=0 // pred_region
    _
  $region5: #{mlp_predictor.1} parent=0 // pred_fallthru
    _
  // Predicated region
  $region6: #{mlp_predictor.1} parent=0 // pred_check
    _
  $region7: #{mlp_predictor.1} parent=0 // pred_check_branch
    %14 = sbr.rel (0) target = $region9
  $region8: #{mlp_predictor.1} parent=0 // pred_region
    _
  $region9: #{mlp_predictor.1} parent=0 // pred_fallthru
    _
  // Predicated region
  $region10: #{mlp_predictor.1} parent=0 // pred_check
    _
  $region11: #{mlp_predictor.1} parent=0 // pred_check_branch
    %16 = sbr.rel (0) target = $region13
  $region12: #{mlp_predictor.1} parent=0 // pred_region
    _
  $region13: #{mlp_predictor.1} parent=0 // pred_fallthru
    _
  // Predicated region
  $region14: #{mlp_predictor.1} parent=0 // pred_check
    _
  $region15: #{mlp_predictor.1} parent=0 // pred_check_branch
    %18 = sbr.rel (0) target = $region17
  $region16: #{mlp_predictor.1} parent=0 // pred_region
    _
  $region17: #{mlp_predictor.1} parent=0 // pred_fallthru
    _
  // Predicated region
  $region18: #{mlp_predictor.1} parent=0 // pred_check
    _
  $region19: #{mlp_predictor.1} parent=0 // pred_check_branch
    %20 = sbr.rel (0) target = $region21
  $region20: #{mlp_predictor.1} parent=0 // pred_region
    _
  $region21: #{mlp_predictor.1} parent=0 // pred_fallthru
    _
  // Predicated region
  $region22: #{mlp_predictor.1} parent=0 // pred_check
    _
  $region23: #{mlp_predictor.1} parent=0 // pred_check_branch
    %22 = sbr.rel (0) target = $region25
  $region24: #{mlp_predictor.1} parent=0 // pred_region
    _
  $region25: #{mlp_predictor.1} parent=0 // pred_fallthru
    _
  %v23 = vlaneseq
  %v24 = vshrl.u32 %v23, 7
  %v25 = vadd.s32 %v24, 8
  %v26 = vadd.s32 %v24, 16
  %v27 = vadd.s32 %v24, 24
  %v28 = vadd.s32 %v24, 32
  %v29 = vld [vmem:[%s0] sm:$0x3]
  %v30 = vlaneseq
  %v31 = vshrl.u32 %v30, 7
  %v32 = vsub.s32 0, %v31
  %v33 = vrot.slane %v29, %v32
  %v34 = vlaneseq
  %v35 = vshrl.u32 %v34, 7
  %v36 = vsub.s32 1, %v35
  %v37 = vrot.slane %v29, %v36
  %vm38 = vcmp.eq.s32.totalorder %v24, %v33
  %vm39 = vcmp.eq.s32.totalorder %v24, %v37
  %vm40 = vcmp.eq.s32.totalorder %v25, %v33
  %vm41 = vcmp.eq.s32.totalorder %v25, %v37
  %vm42 = vcmp.eq.s32.totalorder %v26, %v33
  %vm43 = vcmp.eq.s32.totalorder %v26, %v37
  %vm44 = vcmp.eq.s32.totalorder %v27, %v33
  %vm45 = vcmp.eq.s32.totalorder %v27, %v37
  %vm46 = vcmp.eq.s32.totalorder %v28, %v33
  %vm47 = vcmp.eq.s32.totalorder %v28, %v37
  %v48 = vsel %vm38, 1.0, 0.0
  %v49 = vsel %vm39, 1.0, 0.0
  %v50 = vsel %vm40, 1.0, 0.0
  %v51 = vsel %vm41, 1.0, 0.0
  %v52 = vsel %vm42, 1.0, 0.0
  %v53 = vsel %vm43, 1.0, 0.0
  %v54 = vsel %vm44, 1.0, 0.0
  %v55 = vsel %vm45, 1.0, 0.0
  %v56 = vsel %vm46, 1.0, 0.0
  %v57 = vsel %vm47, 1.0, 0.0
  %v58 = vld [vmem:[%s1] sm:$0x3]
  %v59 = vlaneseq
  %v60 = vshrl.u32 %v59, 7
  %v61 = vsub.s32 0, %v60
  %v62 = vrot.slane %v58, %v61
  %v63 = vlaneseq
  %v64 = vshrl.u32 %v63, 7
  %v65 = vsub.s32 1, %v64
  %v66 = vrot.slane %v58, %v65
  %vm67 = vcmp.eq.s32.totalorder %v24, %v62
  %vm68 = vcmp.eq.s32.totalorder %v24, %v66
  %vm69 = vcmp.eq.s32.totalorder %v25, %v62
  %vm70 = vcmp.eq.s32.totalorder %v25, %v66
  %vm71 = vcmp.eq.s32.totalorder %v26, %v62
  %vm72 = vcmp.eq.s32.totalorder %v26, %v66
  %vm73 = vcmp.eq.s32.totalorder %v27, %v62
  %vm74 = vcmp.eq.s32.totalorder %v27, %v66
  %vm75 = vcmp.eq.s32.totalorder %v28, %v62
  %vm76 = vcmp.eq.s32.totalorder %v28, %v66
  %v77 = vsel %vm67, 1.0, 0.0
  %v78 = vsel %vm68, 1.0, 0.0
  %v79 = vsel %vm69, 1.0, 0.0
  %v80 = vsel %vm70, 1.0, 0.0
  %v81 = vsel %vm71, 1.0, 0.0
  %v82 = vsel %vm72, 1.0, 0.0
  %v83 = vsel %vm73, 1.0, 0.0
  %v84 = vsel %vm74, 1.0, 0.0
  %v85 = vsel %vm75, 1.0, 0.0
  %v86 = vsel %vm76, 1.0, 0.0
  %v87 = vld [vmem:[%s2] sm:$0xff]
  %v88 = vld [vmem:[%s2 + $0x8] sm:$0xff]
  %vm89 = vcmask 277504
  %v91 = vsel %vm89, %v87, 0
  %v94 = vsel %vm89, %v88, 0
  %vm96 = vcmask 1041408
  %v98 = vsel %vm96, %v56, 0
  %v101 = vsel %vm96, %v57, 0
  %103 = vmatprep.subr.mxu0 %v49
  %104 = vmatpush1.msra.mxu0 %v48
  %105 = vmatprep.subr.mxu0 %v51
  %106 = vmatpush1.msra.mxu0 %v50
  %107 = vmatprep.subr.mxu0 %v53
  %108 = vmatpush1.msra.mxu0 %v52
  %109 = vmatprep.subr.mxu0 %v55
  %110 = vmatpush1.msra.mxu0 %v54
  %111 = vmatprep.subr.mxu0 %v101
  %112 = vmatpush1.msra.mxu0 %v98
  %113 = vmatprep.subr.mxu0 0.0
  %114 = vmatpush1.msra.mxu0 0.0
  %115 = vmatprep.subr.mxu0 0.0
  %116 = vmatpush1.msra.mxu0 0.0
  %117 = vmatprep.subr.mxu0 0.0
  %118 = vmatpush1.msra.mxu0 0.0
  %119 = vmatprep.subr.mxu0 0.0
  %120 = vmatpush1.msra.mxu0 0.0
  %121 = vmatprep.subr.mxu0 0.0
  %122 = vmatpush1.msra.mxu0 0.0
  %123 = vmatprep.subr.mxu0 0.0
  %124 = vmatpush1.msra.mxu0 0.0
  %125 = vmatprep.subr.mxu0 0.0
  %126 = vmatpush1.msra.mxu0 0.0
  %127 = vmatprep.subr.mxu0 0.0
  %128 = vmatpush1.msra.mxu0 0.0
  %129 = vmatprep.subr.mxu0 0.0
  %130 = vmatpush1.msra.mxu0 0.0
  %131 = vmatprep.subr.mxu0 0.0
  %132 = vmatpush1.msra.mxu0 0.0
  %133 = vmatprep.subr.mxu0 0.0
  %134 = vmatpush1.msra.mxu0 0.0
  %135 = vmatprep.subr.mxu0 0.0
  %136 = vmatpush1.msra.mxu0 0.0
  %137 = vmatprep.subr.mxu0 0.0
  %138 = vmatpush1.msra.mxu0 0.0
  %139 = vmatprep.subr.mxu0 0.0
  %140 = vmatpush1.msra.mxu0 0.0
  %141 = vmatprep.subr.mxu0 0.0
  %142 = vmatpush1.msra.mxu0 0.0
  %143 = vmatprep.subr.mxu0 0.0
  %144 = vmatpush1.msra.mxu0 0.0
  %145 = vmatprep.subr.mxu0 0.0
  %146 = vmatpush1.msra.mxu0 0.0
  %147 = vmatprep.subr.mxu0 0.0
  %148 = vmatpush1.msra.mxu0 0.0
  %149 = vmatprep.subr.mxu0 0.0
  %150 = vmatpush1.msra.mxu0 0.0
  %151 = vmatprep.subr.mxu0 0.0
  %152 = vmatpush1.msra.mxu0 0.0
  %153 = vmatprep.subr.mxu0 0.0
  %154 = vmatpush1.msra.mxu0 0.0
  %155 = vmatprep.subr.mxu0 0.0
  %156 = vmatpush1.msra.mxu0 0.0
  %157 = vmatprep.subr.mxu0 0.0
  %158 = vmatpush1.msra.mxu0 0.0
  %159 = vmatprep.subr.mxu0 0.0
  %160 = vmatpush1.msra.mxu0 0.0
  %161 = vmatprep.subr.mxu0 0.0
  %162 = vmatpush1.msra.mxu0 0.0
  %163 = vmatprep.subr.mxu0 0.0
  %164 = vmatpush1.msra.mxu0 0.0
  %165 = vmatprep.subr.mxu0 0.0
  %166 = vmatpush1.msra.mxu0 0.0
  %167 = vmatprep.mubr.f32.mxu0 0.0
  %168 = vmatmul.mubr.f32.gmra.mrb[0].mxu0 %v91
  %v169 = vpop.f32.mrb[0].mxu0
  %v170 = vadd.f32 0.0, %v169
  %v171 = vpop.f32.mrb[0].mxu0
  %v172 = vadd.f32 0.0, %v171
  %173 = vmatprep.mubr.f32.mxu0 0.0
  %174 = vmatmul.mubr.f32.gmra.mrb[0].mxu0 %v94
  %v175 = vpop.f32.mrb[0].mxu0
  %v176 = vadd.f32 0.0, %v175
  %v177 = vpop.f32.mrb[0].mxu0
  %v178 = vadd.f32 0.0, %v177
  %179 = vdwg.mxu0
  %v181 = vsel %vm96, %v85, 0
  %v184 = vsel %vm96, %v86, 0
  %186 = vmatprep.subr.mxu0 %v78
  %187 = vmatpush1.msra.mxu0 %v77
  %188 = vmatprep.subr.mxu0 %v80
  %189 = vmatpush1.msra.mxu0 %v79
  %190 = vmatprep.subr.mxu0 %v82
  %191 = vmatpush1.msra.mxu0 %v81
  %192 = vmatprep.subr.mxu0 %v84
  %193 = vmatpush1.msra.mxu0 %v83
  %194 = vmatprep.subr.mxu0 %v184
  %195 = vmatpush1.msra.mxu0 %v181
  %196 = vmatprep.subr.mxu0 0.0
  %197 = vmatpush1.msra.mxu0 0.0
  %198 = vmatprep.subr.mxu0 0.0
  %199 = vmatpush1.msra.mxu0 0.0
  %200 = vmatprep.subr.mxu0 0.0
  %201 = vmatpush1.msra.mxu0 0.0
  %202 = vmatprep.subr.mxu0 0.0
  %203 = vmatpush1.msra.mxu0 0.0
  %204 = vmatprep.subr.mxu0 0.0
  %205 = vmatpush1.msra.mxu0 0.0
  %206 = vmatprep.subr.mxu0 0.0
  %207 = vmatpush1.msra.mxu0 0.0
  %208 = vmatprep.subr.mxu0 0.0
  %209 = vmatpush1.msra.mxu0 0.0
  %210 = vmatprep.subr.mxu0 0.0
  %211 = vmatpush1.msra.mxu0 0.0
  %212 = vmatprep.subr.mxu0 0.0
  %213 = vmatpush1.msra.mxu0 0.0
  %214 = vmatprep.subr.mxu0 0.0
  %215 = vmatpush1.msra.mxu0 0.0
  %216 = vmatprep.subr.mxu0 0.0
  %217 = vmatpush1.msra.mxu0 0.0
  %218 = vmatprep.subr.mxu0 0.0
  %219 = vmatpush1.msra.mxu0 0.0
  %220 = vmatprep.subr.mxu0 0.0
  %221 = vmatpush1.msra.mxu0 0.0
  %222 = vmatprep.subr.mxu0 0.0
  %223 = vmatpush1.msra.mxu0 0.0
  %224 = vmatprep.subr.mxu0 0.0
  %225 = vmatpush1.msra.mxu0 0.0
  %226 = vmatprep.subr.mxu0 0.0
  %227 = vmatpush1.msra.mxu0 0.0
  %228 = vmatprep.subr.mxu0 0.0
  %229 = vmatpush1.msra.mxu0 0.0
  %230 = vmatprep.subr.mxu0 0.0
  %231 = vmatpush1.msra.mxu0 0.0
  %232 = vmatprep.subr.mxu0 0.0
  %233 = vmatpush1.msra.mxu0 0.0
  %234 = vmatprep.subr.mxu0 0.0
  %235 = vmatpush1.msra.mxu0 0.0
  %236 = vmatprep.subr.mxu0 0.0
  %237 = vmatpush1.msra.mxu0 0.0
  %238 = vmatprep.subr.mxu0 0.0
  %239 = vmatpush1.msra.mxu0 0.0
  %240 = vmatprep.subr.mxu0 0.0
  %241 = vmatpush1.msra.mxu0 0.0
  %242 = vmatprep.subr.mxu0 0.0
  %243 = vmatpush1.msra.mxu0 0.0
  %244 = vmatprep.subr.mxu0 0.0
  %245 = vmatpush1.msra.mxu0 0.0
  %246 = vmatprep.subr.mxu0 0.0
  %247 = vmatpush1.msra.mxu0 0.0
  %248 = vmatprep.subr.mxu0 0.0
  %249 = vmatpush1.msra.mxu0 0.0
  %250 = vmatprep.mubr.f32.mxu0 0.0
  %251 = vmatmul.mubr.f32.gmra.mrb[0].mxu0 %v91
  %v252 = vpop.f32.mrb[0].mxu0
  %v253 = vadd.f32 0.0, %v252
  %v254 = vpop.f32.mrb[0].mxu0
  %v255 = vadd.f32 0.0, %v254
  %256 = vmatprep.mubr.f32.mxu0 0.0
  %257 = vmatmul.mubr.f32.gmra.mrb[0].mxu0 %v94
  %v258 = vpop.f32.mrb[0].mxu0
  %v259 = vadd.f32 0.0, %v258
  %v260 = vpop.f32.mrb[0].mxu0
  %v261 = vadd.f32 0.0, %v260
  %262 = vdwg.mxu0
  %v263 = vld [vmem:[%s3] sm:$0x3]
  %v264 = vld [vmem:[%s4] sm:$0x3]
  %vm265 = vcmask 130048
  %v267 = vsel %vm265, %v264, 0
  %269 = vmatprep.subr.mxu0 %v255
  %270 = vmatpush1.msra.mxu0 %v253
  %271 = vmatprep.subr.mxu0 %v261
  %272 = vmatpush1.msra.mxu0 %v259
  %273 = vmatprep.subr.mxu0 0.0
  %274 = vmatpush1.msra.mxu0 0.0
  %275 = vmatprep.subr.mxu0 0.0
  %276 = vmatpush1.msra.mxu0 0.0
  %277 = vmatprep.subr.mxu0 0.0
  %278 = vmatpush1.msra.mxu0 0.0
  %279 = vmatprep.subr.mxu0 0.0
  %280 = vmatpush1.msra.mxu0 0.0
  %281 = vmatprep.subr.mxu0 0.0
  %282 = vmatpush1.msra.mxu0 0.0
  %283 = vmatprep.subr.mxu0 0.0
  %284 = vmatpush1.msra.mxu0 0.0
  %285 = vmatprep.subr.mxu0 0.0
  %286 = vmatpush1.msra.mxu0 0.0
  %287 = vmatprep.subr.mxu0 0.0
  %288 = vmatpush1.msra.mxu0 0.0
  %289 = vmatprep.subr.mxu0 0.0
  %290 = vmatpush1.msra.mxu0 0.0
  %291 = vmatprep.subr.mxu0 0.0
  %292 = vmatpush1.msra.mxu0 0.0
  %293 = vmatprep.subr.mxu0 0.0
  %294 = vmatpush1.msra.mxu0 0.0
  %295 = vmatprep.subr.mxu0 0.0
  %296 = vmatpush1.msra.mxu0 0.0
  %297 = vmatprep.subr.mxu0 0.0
  %298 = vmatpush1.msra.mxu0 0.0
  %299 = vmatprep.subr.mxu0 0.0
  %300 = vmatpush1.msra.mxu0 0.0
  %301 = vmatprep.subr.mxu0 0.0
  %302 = vmatpush1.msra.mxu0 0.0
  %303 = vmatprep.subr.mxu0 0.0
  %304 = vmatpush1.msra.mxu0 0.0
  %305 = vmatprep.subr.mxu0 0.0
  %306 = vmatpush1.msra.mxu0 0.0
  %307 = vmatprep.subr.mxu0 0.0
  %308 = vmatpush1.msra.mxu0 0.0
  %309 = vmatprep.subr.mxu0 0.0
  %310 = vmatpush1.msra.mxu0 0.0
  %311 = vmatprep.subr.mxu0 0.0
  %312 = vmatpush1.msra.mxu0 0.0
  %313 = vmatprep.subr.mxu0 0.0
  %314 = vmatpush1.msra.mxu0 0.0
  %315 = vmatprep.subr.mxu0 0.0
  %316 = vmatpush1.msra.mxu0 0.0
  %317 = vmatprep.subr.mxu0 0.0
  %318 = vmatpush1.msra.mxu0 0.0
  %319 = vmatprep.subr.mxu0 0.0
  %320 = vmatpush1.msra.mxu0 0.0
  %321 = vmatprep.subr.mxu0 0.0
  %322 = vmatpush1.msra.mxu0 0.0
  %323 = vmatprep.subr.mxu0 0.0
  %324 = vmatpush1.msra.mxu0 0.0
  %325 = vmatprep.subr.mxu0 0.0
  %326 = vmatpush1.msra.mxu0 0.0
  %327 = vmatprep.subr.mxu0 0.0
  %328 = vmatpush1.msra.mxu0 0.0
  %329 = vmatprep.subr.mxu0 0.0
  %330 = vmatpush1.msra.mxu0 0.0
  %331 = vmatprep.subr.mxu0 0.0
  %332 = vmatpush1.msra.mxu0 0.0
  %333 = vmatprep.mubr.f32.mxu0 0.0
  %334 = vmatmul.mubr.f32.gmra.mrb[0].mxu0 %v267
  %v335 = vpop.f32.mrb[0].mxu0
  %v336 = vadd.f32 0.0, %v335
  %v337 = vpop.f32.mrb[0].mxu0
  %v338 = vadd.f32 0.0, %v337
  %339 = vdwg.mxu0
  %v341 = vsel %vm265, %v263, 0
  %343 = vmatprep.subr.mxu0 %v172
  %344 = vmatpush1.msra.mxu0 %v170
  %345 = vmatprep.subr.mxu0 %v178
  %346 = vmatpush1.msra.mxu0 %v176
  %347 = vmatprep.subr.mxu0 0.0
  %348 = vmatpush1.msra.mxu0 0.0
  %349 = vmatprep.subr.mxu0 0.0
  %350 = vmatpush1.msra.mxu0 0.0
  %351 = vmatprep.subr.mxu0 0.0
  %352 = vmatpush1.msra.mxu0 0.0
  %353 = vmatprep.subr.mxu0 0.0
  %354 = vmatpush1.msra.mxu0 0.0
  %355 = vmatprep.subr.mxu0 0.0
  %356 = vmatpush1.msra.mxu0 0.0
  %357 = vmatprep.subr.mxu0 0.0
  %358 = vmatpush1.msra.mxu0 0.0
  %359 = vmatprep.subr.mxu0 0.0
  %360 = vmatpush1.msra.mxu0 0.0
  %361 = vmatprep.subr.mxu0 0.0
  %362 = vmatpush1.msra.mxu0 0.0
  %363 = vmatprep.subr.mxu0 0.0
  %364 = vmatpush1.msra.mxu0 0.0
  %365 = vmatprep.subr.mxu0 0.0
  %366 = vmatpush1.msra.mxu0 0.0
  %367 = vmatprep.subr.mxu0 0.0
  %368 = vmatpush1.msra.mxu0 0.0
  %369 = vmatprep.subr.mxu0 0.0
  %370 = vmatpush1.msra.mxu0 0.0
  %371 = vmatprep.subr.mxu0 0.0
  %372 = vmatpush1.msra.mxu0 0.0
  %373 = vmatprep.subr.mxu0 0.0
  %374 = vmatpush1.msra.mxu0 0.0
  %375 = vmatprep.subr.mxu0 0.0
  %376 = vmatpush1.msra.mxu0 0.0
  %377 = vmatprep.subr.mxu0 0.0
  %378 = vmatpush1.msra.mxu0 0.0
  %379 = vmatprep.subr.mxu0 0.0
  %380 = vmatpush1.msra.mxu0 0.0
  %381 = vmatprep.subr.mxu0 0.0
  %382 = vmatpush1.msra.mxu0 0.0
  %383 = vmatprep.subr.mxu0 0.0
  %384 = vmatpush1.msra.mxu0 0.0
  %385 = vmatprep.subr.mxu0 0.0
  %386 = vmatpush1.msra.mxu0 0.0
  %387 = vmatprep.subr.mxu0 0.0
  %388 = vmatpush1.msra.mxu0 0.0
  %389 = vmatprep.subr.mxu0 0.0
  %390 = vmatpush1.msra.mxu0 0.0
  %391 = vmatprep.subr.mxu0 0.0
  %392 = vmatpush1.msra.mxu0 0.0
  %393 = vmatprep.subr.mxu0 0.0
  %394 = vmatpush1.msra.mxu0 0.0
  %395 = vmatprep.subr.mxu0 0.0
  %396 = vmatpush1.msra.mxu0 0.0
  %397 = vmatprep.subr.mxu0 0.0
  %398 = vmatpush1.msra.mxu0 0.0
  %399 = vmatprep.subr.mxu0 0.0
  %400 = vmatpush1.msra.mxu0 0.0
  %401 = vmatprep.subr.mxu0 0.0
  %402 = vmatpush1.msra.mxu0 0.0
  %403 = vmatprep.subr.mxu0 0.0
  %404 = vmatpush1.msra.mxu0 0.0
  %405 = vmatprep.subr.mxu0 0.0
  %406 = vmatpush1.msra.mxu0 0.0
  %407 = vmatprep.mubr.f32.mxu0 0.0
  %408 = vmatmul.mubr.f32.gmra.mrb[0].mxu0 %v341
  %v409 = vpop.f32.mrb[0].mxu0
  %v410 = vadd.f32 %v336, %v409
  %v411 = vpop.f32.mrb[0].mxu0
  %v412 = vadd.f32 %v338, %v411
  %413 = vdwg.mxu0
  %v414 = vld [vmem:[%s5] sm:$0x3]
  %416 = vset.pattern.permute.xlu0 0
  %417 = vperm.xlu0 %416, %v414
  %v418 = vpop.permute.xlu0 %417
  %v420 = vadd.f32 %v410, %v418
  %v421 = vadd.f32 %v412, %v418
  %v424 = vcombine.low %v420, %v421
  %v426 = vunpack.c.l.s4 1983009808
  %v427 = vunpack.c.0.s8 %v426
  %v428 = vlaneseq
  %v429 = vshrl.u32 %v428, 7
  %v430 = vsub.s32 %v427, %v429
  %v431 = vrot.slane %v424, %v430
  %433 = vst [vmem:[%s6] sm:$0xf] %v431
  // Predicated region
  $region26: #{mlp_predictor.1} parent=0 // pred_check
    _
  $region27: #{mlp_predictor.1} parent=0 // pred_check_branch
    %435 = sbr.rel (0) target = $region29
  $region28: #{mlp_predictor.1} parent=0 // pred_region
    _
  $region29: #{mlp_predictor.1} parent=0 // pred_fallthru
    _
  // Predicated region
  $region30: #{mlp_predictor.1} parent=0 // pred_check
    _
  $region31: #{mlp_predictor.1} parent=0 // pred_check_branch
    %437 = sbr.rel (0) target = $region33
  $region32: #{mlp_predictor.1} parent=0 // pred_region
    _
  $region33: #{mlp_predictor.1} parent=0 // pred_fallthru
    _

</llo_original>
